<compile_context>
chip_gen: v7x
topology: tpu7x:2x2x1
jax: 0.10.0
libtpu: 0.0.40
codegen_flags: <defaults>
</compile_context>

<pallas_src>
import functools

import jax
import jax.numpy as jnp
from jax import lax
from jax.experimental import pallas as pl
from jax.experimental.pallas import tpu as pltpu

EPS = 1e-5                        # nn.BatchNorm2d default eps
LANE = 128                        # channel (lane) dim padded to this
MAX_TILE_M = 512                  # rows per grid step
VMEM_LIMIT_BYTES = 48 * 1024 * 1024   # explicit; fits v7x 64 MiB physical VMEM


def _round_up(x, m):
    return (x + m - 1) // m * m


# ---------------------------------------------------------------------------
# In-kernel helpers
# ---------------------------------------------------------------------------
def _bn_apply(x, total, total_sq, gamma, beta, inv_count):
    """Normalize x (rows, Cp) with global batch stats. All math in f32."""
    mean = total * inv_count
    var = jnp.maximum(total_sq * inv_count - mean * mean, 0.0)  # clamp cancellation
    return (x - mean) * jax.lax.rsqrt(var + EPS) * gamma + beta


# ---------------------------------------------------------------------------
# Pass A kernels: conv tile (single K=9*Cin matmul) + batch-stat accumulation
# ---------------------------------------------------------------------------
def conv_stats_kernel(p_ref, w_ref, y_ref, csum_ref, csq_ref, *, prenorm):
    acc = jnp.dot(p_ref[...], w_ref[...], preferred_element_type=jnp.float32)
    if prenorm:                       # prenorm: BN sees relu(conv(x))
        acc = jnp.maximum(acc, 0.0)
    y_ref[...] = acc.astype(y_ref.dtype)

    @pl.when(pl.program_id(0) == 0)
    def _init():
        csum_ref[...] = jnp.zeros_like(csum_ref)
        csq_ref[...] = jnp.zeros_like(csq_ref)

    csum_ref[...] += jnp.sum(acc, axis=0, keepdims=True)
    csq_ref[...] += jnp.sum(acc * acc, axis=0, keepdims=True)


def conv_sc_stats_kernel(p_ref, w_ref, sc_ref, y_ref, csum_ref, csq_ref,
                         ssum_ref, ssq_ref, *, prenorm):
    acc = jnp.dot(p_ref[...], w_ref[...], preferred_element_type=jnp.float32)
    if prenorm:
        acc = jnp.maximum(acc, 0.0)
    y_ref[...] = acc.astype(y_ref.dtype)
    sc = sc_ref[...].astype(jnp.float32)

    @pl.when(pl.program_id(0) == 0)
    def _init():
        csum_ref[...] = jnp.zeros_like(csum_ref)
        csq_ref[...] = jnp.zeros_like(csq_ref)
        ssum_ref[...] = jnp.zeros_like(ssum_ref)
        ssq_ref[...] = jnp.zeros_like(ssq_ref)

    csum_ref[...] += jnp.sum(acc, axis=0, keepdims=True)
    csq_ref[...] += jnp.sum(acc * acc, axis=0, keepdims=True)
    ssum_ref[...] += jnp.sum(sc, axis=0, keepdims=True)
    ssq_ref[...] += jnp.sum(sc * sc, axis=0, keepdims=True)


# ---------------------------------------------------------------------------
# Pass B kernels: tiled normalize (+ residual) (+ ReLU)
# ---------------------------------------------------------------------------
def bn_act_kernel(y_ref, csum_ref, csq_ref, g_ref, b_ref, o_ref, *, inv_count, prenorm):
    y = y_ref[...].astype(jnp.float32)
    out = _bn_apply(y, csum_ref[...], csq_ref[...], g_ref[...], b_ref[...], inv_count)
    if not prenorm:                   # postnorm: relu(bn(conv(x)))
        out = jnp.maximum(out, 0.0)
    o_ref[...] = out.astype(o_ref.dtype)


def bn_residual_kernel(y_ref, sc_ref, csum_ref, csq_ref, ssum_ref, ssq_ref,
                       g2_ref, b2_ref, g3_ref, b3_ref, o_ref,
                       *, inv_count, prenorm, do_bn3):
    y = y_ref[...].astype(jnp.float32)
    out = _bn_apply(y, csum_ref[...], csq_ref[...], g2_ref[...], b2_ref[...], inv_count)
    sc = sc_ref[...].astype(jnp.float32)
    if do_bn3:                        # zero-padding shortcut goes through bn3
        sc = _bn_apply(sc, ssum_ref[...], ssq_ref[...], g3_ref[...], b3_ref[...], inv_count)
    res = out + sc
    if not prenorm:
        res = jnp.maximum(res, 0.0)
    o_ref[...] = res.astype(o_ref.dtype)


# ---------------------------------------------------------------------------
# Wrapper (layout glue: padding, im2col, channel lane-padding)
# ---------------------------------------------------------------------------
def _extract_patches(xp, stride):
    """xp: NHWC already spatially padded by 1. Returns ((M, 9*C), (n, ho, wo))."""
    n, hp, wp, c = xp.shape
    ho = (hp - 3) // stride + 1
    wo = (wp - 3) // stride + 1
    cols = []
    for kh in range(3):
        for kw in range(3):
            p = xp[:, kh:kh + stride * (ho - 1) + 1:stride,
                   kw:kw + stride * (wo - 1) + 1:stride, :]
            cols.append(p.reshape(n * ho * wo, c))
    # TODO(synk): generate the 9 taps inside the kernel from an overlapping
    # spatial window (manual DMA) instead of materializing the 9x slab in HBM.
    return jnp.concatenate(cols, axis=1), (n, ho, wo)


def _pad_rows(a, rows):
    return jnp.pad(a, ((0, rows - a.shape[0]), (0, 0)))


def _pad_vec(v, cp):
    v = jnp.asarray(v, jnp.float32).reshape(1, -1)
    return jnp.pad(v, ((0, 0), (0, cp - v.shape[1])))


def block_forward(x_nchw, params, *, stride=1, prenorm=False):
    """Forward pass of `Block` (bias=False, kernel=3, padding=1), NCHW in/out."""
    w1 = params["w1"]          # (3, 3, Cin, Cout)
    w2 = params["w2"]          # (3, 3, Cout, Cout)

    cin = x_nchw.shape[1]
    cout = w1.shape[-1]
    downsampling = cin != cout             # module: 'zero_padding' iff cin != cout
    cp = _round_up(cout, LANE)             # lane-dense channel width

    x = jnp.transpose(x_nchw, (0, 2, 3, 1)).astype(jnp.float32)    # NHWC
    n, h, w, _ = x.shape

    # ---------------- conv1 im2col ----------------
    xpad = jnp.pad(x, ((0, 0), (1, 1), (1, 1), (0, 0)))
    p1, (_, ho, wo) = _extract_patches(xpad, stride)       # (M, 9*Cin)
    m = n * ho * wo
    tile_m = min(MAX_TILE_M, _round_up(m, 8))
    m_pad = _round_up(m, tile_m)
    grid = (m_pad // tile_m,)
    # zero-padded rows contribute 0 to sum/sumsq, so the true count stays exact
    inv_count = 1.0 / float(m)

    k1 = 9 * cin
    p1 = _pad_rows(p1, m_pad).astype(jnp.bfloat16)
    w1p = jnp.pad(w1.astype(jnp.float32).reshape(k1, cout),
                  ((0, 0), (0, cp - cout))).astype(jnp.bfloat16)
    g1p, b1p = _pad_vec(params["g1"], cp), _pad_vec(params["b1"], cp)
    g2p, b2p = _pad_vec(params["g2"], cp), _pad_vec(params["b2"], cp)
    g3p, b3p = _pad_vec(params["g3"], cp), _pad_vec(params["b3"], cp)

    row_spec = lambda lanes: pl.BlockSpec((tile_m, lanes), lambda i: (i, 0))
    full_spec = lambda rows, lanes: pl.BlockSpec((rows, lanes), lambda i: (0, 0))
    stat_spec = full_spec(1, cp)
    stat_shape = jax.ShapeDtypeStruct((1, cp), jnp.float32)

    acc_params = pltpu.CompilerParams(
        dimension_semantics=("arbitrary",),            # stats carried across tiles
        vmem_limit_bytes=VMEM_LIMIT_BYTES)
    par_params = pltpu.CompilerParams(
        dimension_semantics=("parallel",),             # independent tiles
        vmem_limit_bytes=VMEM_LIMIT_BYTES)

    # ---- pass A: conv1 + bn1 batch stats ----
    y1_raw, csum1, csq1 = pl.pallas_call(
        functools.partial(conv_stats_kernel, prenorm=prenorm),
        grid=grid,
        in_specs=[row_spec(k1), full_spec(k1, cp)],
        out_specs=[row_spec(cp), stat_spec, stat_spec],
        out_shape=[jax.ShapeDtypeStruct((m_pad, cp), jnp.bfloat16),
                   stat_shape, stat_shape],
        compiler_params=acc_params,
    )(p1, w1p)

    # ---- pass B: bn1 (+ relu) ----
    y1 = pl.pallas_call(
        functools.partial(bn_act_kernel, inv_count=inv_count, prenorm=prenorm),
        grid=grid,
        in_specs=[row_spec(cp), stat_spec, stat_spec, stat_spec, stat_spec],
        out_specs=row_spec(cp),
        out_shape=jax.ShapeDtypeStruct((m_pad, cp), jnp.bfloat16),
        compiler_params=par_params,
    )(y1_raw, csum1, csq1, g1p, b1p)

    # ---------------- conv2 im2col ----------------
    # TODO(synk): keep the y1 tile resident in VMEM and window conv2 from it to
    # remove this HBM round-trip + 9x re-read (full conv-conv fusion).
    y1_nhwc = y1[:m].reshape(n, ho, wo, cp)
    y1pad = jnp.pad(y1_nhwc, ((0, 0), (1, 1), (1, 1), (0, 0)))
    p2, _ = _extract_patches(y1pad, 1)                      # (M, 9*Cp) bf16
    p2 = _pad_rows(p2, m_pad)
    k2 = 9 * cp
    w2p = jnp.pad(w2.astype(jnp.float32),
                  ((0, 0), (0, 0), (0, cp - cout), (0, cp - cout))
                  ).reshape(k2, cp).astype(jnp.bfloat16)

    # ---------------- shortcut ----------------
    if downsampling:
        # MaxPool2d(kernel_size=1, stride=2) == spatial subsampling.
        xd = x[:, ::2, ::2, :]
        assert xd.shape[1:3] == (ho, wo) and cout == 2 * cin, \
            "inconsistent Block configuration for zero_padding shortcut"
        # Only the real channels are moved; channels [cin, cp) stay zero and
        # bn3 of an all-zero channel is exactly beta3 (matches torch.cat+bn3).
        sc = _pad_rows(jnp.pad(xd.reshape(m, cin), ((0, 0), (0, cp - cin))), m_pad)
        do_bn3 = True
    else:
        assert (ho, wo) == (h, w), "identity shortcut requires stride 1"
        sc = _pad_rows(jnp.pad(x.reshape(m, cout), ((0, 0), (0, cp - cout))), m_pad)
        do_bn3 = False

    # ---- pass A: conv2 + bn2 / bn3 batch stats ----
    y2_raw, csum2, csq2, ssum, ssq = pl.pallas_call(
        functools.partial(conv_sc_stats_kernel, prenorm=prenorm),
        grid=grid,
        in_specs=[row_spec(k2), full_spec(k2, cp), row_spec(cp)],
        out_specs=[row_spec(cp), stat_spec, stat_spec, stat_spec, stat_spec],
        out_shape=[jax.ShapeDtypeStruct((m_pad, cp), jnp.bfloat16),
                   stat_shape, stat_shape, stat_shape, stat_shape],
        compiler_params=acc_params,
    )(p2, w2p, sc)

    # ---- pass B: bn2 (+ bn3) + residual add (+ relu) ----
    out = pl.pallas_call(
        functools.partial(bn_residual_kernel, inv_count=inv_count,
                          prenorm=prenorm, do_bn3=do_bn3),
        grid=grid,
        in_specs=[row_spec(cp), row_spec(cp)] + [stat_spec] * 8,
        out_specs=row_spec(cp),
        out_shape=jax.ShapeDtypeStruct((m_pad, cp), jnp.float32),
        compiler_params=par_params,
    )(y2_raw, sc, csum2, csq2, ssum, ssq, g2p, b2p, g3p, b3p)

    out = out[:m, :cout].reshape(n, ho, wo, cout)
    return jnp.transpose(out, (0, 3, 1, 2))


def init_params(key, cin, cout):
    """Deterministic synthetic parameters (conv ~ N(0, 1/fan_in), BN affine init)."""
    k1, k2 = jax.random.split(key)
    w1 = jax.random.normal(k1, (3, 3, cin, cout), jnp.float32) * (1.0 / (3 * 3 * cin) ** 0.5)
    w2 = jax.random.normal(k2, (3, 3, cout, cout), jnp.float32) * (1.0 / (3 * 3 * cout) ** 0.5)
    ones = jnp.ones((cout,), jnp.float32)
    zeros = jnp.zeros((cout,), jnp.float32)
    # TODO(synk): BatchNorm running_mean/running_var buffer updates (training-mode
    # side effect) are not materialized; they do not affect the forward output.
    return dict(w1=w1, g1=ones, b1=zeros, w2=w2, g2=ones, b2=zeros, g3=ones, b3=zeros)


def _reference_block(x_nchw, params, *, stride, prenorm):
    """Pure-JAX (XLA) reference of the PyTorch Block forward (training-mode BN)."""
    x = jnp.transpose(x_nchw, (0, 2, 3, 1)).astype(jnp.float32)
    cin, cout = x.shape[-1], params["w1"].shape[-1]

    def conv(t, w, s):
        return lax.conv_general_dilated(t, w, (s, s), ((1, 1), (1, 1)),
                                        dimension_numbers=("NHWC", "HWIO", "NHWC"))

    def bn(t, g, b):
        mean = jnp.mean(t, axis=(0, 1, 2), keepdims=True)
        var = jnp.mean((t - mean) ** 2, axis=(0, 1, 2), keepdims=True)
        return (t - mean) * jax.lax.rsqrt(var + EPS) * g.reshape(1, 1, 1, -1) \
            + b.reshape(1, 1, 1, -1)

    relu = lambda t: jnp.maximum(t, 0.0)
    if prenorm:
        out = bn(relu(conv(x, params["w1"], stride)), params["g1"], params["b1"])
        out = bn(relu(conv(out, params["w2"], 1)), params["g2"], params["b2"])
    else:
        out = relu(bn(conv(x, params["w1"], stride), params["g1"], params["b1"]))
        out = bn(conv(out, params["w2"], 1), params["g2"], params["b2"])
    if cin != cout:
        xd = x[:, ::2, ::2, :]
        sc = bn(jnp.concatenate([xd, jnp.zeros_like(xd)], axis=-1),
                params["g3"], params["b3"])
    else:
        sc = x
    res = out + sc
    if not prenorm:
        res = relu(res)
    return jnp.transpose(res, (0, 3, 1, 2))


if __name__ == "__main__":
    key = jax.random.PRNGKey(0)
    kx1, kp1, kx2, kp2 = jax.random.split(key, 4)

    # Config 1: downsampling block (cin != cout, stride 2, zero-padding shortcut + bn3)
    N, CIN, H, W = 2, 4, 16, 16
    COUT, STRIDE = 8, 2
    x = jax.random.normal(kx1, (N, CIN, H, W), jnp.float32)
    params = init_params(kp1, CIN, COUT)
    out = jax.block_until_ready(block_forward(x, params, stride=STRIDE, prenorm=False))
    assert out.shape == (N, COUT, H // STRIDE, W // STRIDE)
    assert bool(jnp.all(jnp.isfinite(out)))
    ref = _reference_block(x, params, stride=STRIDE, prenorm=False)
    err = float(jnp.max(jnp.abs(out - ref)))
    assert err < 0.2, f"downsampling block mismatch vs reference: max|diff|={err}"

    # Config 2: identity block (cin == cout, stride 1, plain residual add)
    x2 = jax.random.normal(kx2, (N, COUT, H, W), jnp.float32)
    params2 = init_params(kp2, COUT, COUT)
    out2 = jax.block_until_ready(block_forward(x2, params2, stride=1, prenorm=False))
    assert out2.shape == (N, COUT, H, W)
    assert bool(jnp.all(jnp.isfinite(out2)))
    ref2 = _reference_block(x2, params2, stride=1, prenorm=False)
    err2 = float(jnp.max(jnp.abs(out2 - ref2)))
    assert err2 < 0.2, f"identity block mismatch vs reference: max|diff|={err2}"

    print("KERNEL_OK")
</pallas_src>

<mosaic_0001>
module attributes {stable_mosaic.version = 11 : i64} {
  func.func @conv_stats_kernel(%arg0: i32, %arg1: memref<128x36xbf16, #tpu.memory_space<vmem>>, %arg2: memref<36x128xbf16, #tpu.memory_space<vmem>>, %arg3: memref<128x128xbf16, #tpu.memory_space<vmem>>, %arg4: memref<1x128xf32, #tpu.memory_space<vmem>>, %arg5: memref<1x128xf32, #tpu.memory_space<vmem>>) attributes {dimension_semantics = [#tpu.dimension_semantics<arbitrary>], iteration_bounds = array<i64: 1>, scalar_prefetch = 0 : i64, scratch_operands = 0 : i64, tpu.core_type = #tpu.core_type<tc>, window_params = [{transform_indices = @transform_0, window_bounds = array<i64: 128, 36>}, {pipeline_mode = #tpu.pipeline_mode<synchronous>, transform_indices = @transform_1, window_bounds = array<i64: 36, 128>}, {transform_indices = @transform_2, window_bounds = array<i64: 128, 128>}, {pipeline_mode = #tpu.pipeline_mode<synchronous>, transform_indices = @transform_3, window_bounds = array<i64: 1, 128>}, {pipeline_mode = #tpu.pipeline_mode<synchronous>, transform_indices = @transform_4, window_bounds = array<i64: 1, 128>}]} {
    %c0 = arith.constant 0 : index
    %c0_0 = arith.constant 0 : index
    %0 = vector.load %arg1[%c0, %c0_0] : memref<128x36xbf16, #tpu.memory_space<vmem>>, vector<128x36xbf16>
    %c0_1 = arith.constant 0 : index
    %c0_2 = arith.constant 0 : index
    %1 = vector.load %arg2[%c0_1, %c0_2] : memref<36x128xbf16, #tpu.memory_space<vmem>>, vector<36x128xbf16>
    %cst = arith.constant dense<0.000000e+00> : vector<128x128xf32>
    %2 = tpu.matmul %0, %1, %cst {dimension_numbers = #tpu.dot_dimension_numbers<[1], [0], [0], [1], [0, 0, 1, 1], [], []>} : vector<128x36xbf16>, vector<36x128xbf16>, vector<128x128xf32> -> vector<128x128xf32>
    %3 = arith.truncf %2 : vector<128x128xf32> to vector<128x128xbf16>
    %c0_3 = arith.constant 0 : index
    %c0_4 = arith.constant 0 : index
    %4 = vector.load %arg3[%c0_3, %c0_4] : memref<128x128xbf16, #tpu.memory_space<vmem>>, vector<128x128xbf16>
    tpu.vector_store %arg3[%c0_3, %c0_4], %3 {strides = array<i32>} : memref<128x128xbf16, #tpu.memory_space<vmem>>, vector<128x128xbf16>,
    %c0_i32 = arith.constant 0 : i32
    %5 = arith.cmpi eq, %arg0, %c0_i32 : i32
    %6 = arith.extui %5 : i1 to i32
    %c0_i32_5 = arith.constant 0 : i32
    %7 = arith.cmpi ne, %6, %c0_i32_5 : i32
    scf.if %7 {
      %cst_16 = arith.constant 0.000000e+00 : f32
      %19 = vector.broadcast %cst_16 : f32 to vector<1x128xf32>
      %c0_17 = arith.constant 0 : index
      %c0_18 = arith.constant 0 : index
      %20 = vector.load %arg4[%c0_17, %c0_18] : memref<1x128xf32, #tpu.memory_space<vmem>>, vector<1x128xf32>
      tpu.vector_store %arg4[%c0_17, %c0_18], %19 {strides = array<i32>} : memref<1x128xf32, #tpu.memory_space<vmem>>, vector<1x128xf32>,
      %cst_19 = arith.constant 0.000000e+00 : f32
      %21 = vector.broadcast %cst_19 : f32 to vector<1x128xf32>
      %c0_20 = arith.constant 0 : index
      %c0_21 = arith.constant 0 : index
      %22 = vector.load %arg5[%c0_20, %c0_21] : memref<1x128xf32, #tpu.memory_space<vmem>>, vector<1x128xf32>
      tpu.vector_store %arg5[%c0_20, %c0_21], %21 {strides = array<i32>} : memref<1x128xf32, #tpu.memory_space<vmem>>, vector<1x128xf32>,
    } else {
    }
    %c0_6 = arith.constant 0 : index
    %c0_7 = arith.constant 0 : index
    %8 = vector.load %arg4[%c0_6, %c0_7] : memref<1x128xf32, #tpu.memory_space<vmem>>, vector<1x128xf32>
    %cst_8 = arith.constant dense<0.000000e+00> : vector<128xf32>
    %9 = vector.multi_reduction <add>, %2, %cst_8 [0] : vector<128x128xf32> to vector<128xf32>
    %10 = vector.shape_cast %9 : vector<128xf32> to vector<1x128xf32>
    %11 = arith.addf %8, %10 : vector<1x128xf32>
    %c0_9 = arith.constant 0 : index
    %c0_10 = arith.constant 0 : index
    %12 = vector.load %arg4[%c0_9, %c0_10] : memref<1x128xf32, #tpu.memory_space<vmem>>, vector<1x128xf32>
    tpu.vector_store %arg4[%c0_9, %c0_10], %11 {strides = array<i32>} : memref<1x128xf32, #tpu.memory_space<vmem>>, vector<1x128xf32>,
    %c0_11 = arith.constant 0 : index
    %c0_12 = arith.constant 0 : index
    %13 = vector.load %arg5[%c0_11, %c0_12] : memref<1x128xf32, #tpu.memory_space<vmem>>, vector<1x128xf32>
    %14 = arith.mulf %2, %2 : vector<128x128xf32>
    %cst_13 = arith.constant dense<0.000000e+00> : vector<128xf32>
    %15 = vector.multi_reduction <add>, %14, %cst_13 [0] : vector<128x128xf32> to vector<128xf32>
    %16 = vector.shape_cast %15 : vector<128xf32> to vector<1x128xf32>
    %17 = arith.addf %13, %16 : vector<1x128xf32>
    %c0_14 = arith.constant 0 : index
    %c0_15 = arith.constant 0 : index
    %18 = vector.load %arg5[%c0_14, %c0_15] : memref<1x128xf32, #tpu.memory_space<vmem>>, vector<1x128xf32>
    tpu.vector_store %arg5[%c0_14, %c0_15], %17 {strides = array<i32>} : memref<1x128xf32, #tpu.memory_space<vmem>>, vector<1x128xf32>,
    return
  }
  func.func @transform_0(%arg0: i32) -> (i32, i32) {
    %c0_i32 = arith.constant 0 : i32
    %c0_i32_0 = arith.constant 0 : i32
    return %arg0, %c0_i32 : i32, i32
  }
  func.func @transform_1(%arg0: i32) -> (i32, i32) {
    %c0_i32 = arith.constant 0 : i32
    %c0_i32_0 = arith.constant 0 : i32
    %c0_i32_1 = arith.constant 0 : i32
    return %c0_i32, %c0_i32_0 : i32, i32
  }
  func.func @transform_2(%arg0: i32) -> (i32, i32) {
    %c0_i32 = arith.constant 0 : i32
    %c0_i32_0 = arith.constant 0 : i32
    return %arg0, %c0_i32 : i32, i32
  }
  func.func @transform_3(%arg0: i32) -> (i32, i32) {
    %c0_i32 = arith.constant 0 : i32
    %c0_i32_0 = arith.constant 0 : i32
    %c0_i32_1 = arith.constant 0 : i32
    return %c0_i32, %c0_i32_0 : i32, i32
  }
  func.func @transform_4(%arg0: i32) -> (i32, i32) {
    %c0_i32 = arith.constant 0 : i32
    %c0_i32_0 = arith.constant 0 : i32
    %c0_i32_1 = arith.constant 0 : i32
    return %c0_i32, %c0_i32_0 : i32, i32
  }
}

</mosaic_0001>

<llo_original>
// kernel: tpu_custom_call.1
$region0: #{tpu_custom_call.1}
  #allocation0 [shape = 'u32[]', space=smem, size = 0x4, offset = 0x4, fixed_abs, tag = 'smem constant byte address 0x4 - core index']
  #allocation1 [shape = 'u32[144,128]{1,0:T(1,128)}', space=vmem, size = 0x12000, scoped, tag = 'internal scratch']
  %s0 = inlined_call_operand.vmem [shape: bf16[128,36], index: 0, kind: input, shape index: {}]
  %s1 = inlined_call_operand.vmem [shape: bf16[36,128], index: 1, kind: input, shape index: {}]
  %s2 = inlined_call_operand.hbm [shape: bf16[128,128], index: 2, kind: output, shape index: {0}]
  %s3 = inlined_call_operand.hbm [shape: f32[1,128], index: 3, kind: output, shape index: {1}]
  %s4 = inlined_call_operand.hbm [shape: f32[1,128], index: 4, kind: output, shape index: {2}]
  %5 = xla_tuple %s2, %s3, %s4
  %s6 = sld [smem:[#allocation0]]
  $region38: #{tpu_custom_call.1} parent=0
    _
  %s8 = ssub.s32 1, %s6
  %s9 = scalar_select 0, %s8, %s6
  $region1: #{tpu_custom_call.1} parent=0
    #allocation2 [shape = 'u8[32768]{0}', space=vmem, size = 0x8000, scoped, tag = 'output window, operand 0, single buffered']
    #allocation3 [shape = 's32[1]{0}', space=sflag, size = 0x4, scoped, tag = 'scoped memory for tpu_custom_call.1']
    #allocation4 [shape = 'u8[512]{0}', space=vmem, size = 0x400, scoped, tag = 'output window, operand 1, single buffered']
    #allocation5 [shape = 's32[1]{0}', space=sflag, size = 0x4, scoped, tag = 'scoped memory for tpu_custom_call.1']
    #allocation6 [shape = 'u8[512]{0}', space=vmem, size = 0x400, scoped, tag = 'output window, operand 2, single buffered']
    %10 = vsyncpa [#allocation3], 0
    %11 = vsyncpa [#allocation5], 0
    // Predicated region
    $region2: #{tpu_custom_call.1} parent=1 // pred_check
      _
    $region3: #{tpu_custom_call.1} parent=1 // pred_check_branch
      %13 = sbr.rel (0) target = $region5
    $region4: #{tpu_custom_call.1} parent=1 // pred_region
      _
    $region5: #{tpu_custom_call.1} parent=1 // pred_fallthru
      _
    // Predicated region
    $region6: #{tpu_custom_call.1} parent=1 // pred_check
      _
    $region7: #{tpu_custom_call.1} parent=1 // pred_check_branch
      %15 = sbr.rel (0) target = $region9
    $region8: #{tpu_custom_call.1} parent=1 // pred_region
      _
    $region9: #{tpu_custom_call.1} parent=1 // pred_fallthru
      _
    %v17 = vld [vmem:[%s0] sm:$0xf]
    %v18 = vld [vmem:[%s0 + $0x4] sm:$0xf]
    %v19 = vld [vmem:[%s0 + $0x8] sm:$0xf]
    %v20 = vld [vmem:[%s0 + $0xc] sm:$0xf]
    %v21 = vld [vmem:[%s0 + $0x10] sm:$0xf]
    %v22 = vld [vmem:[%s0 + $0x14] sm:$0xf]
    %v23 = vld [vmem:[%s0 + $0x18] sm:$0xf]
    %v24 = vld [vmem:[%s0 + $0x1c] sm:$0xf]
    %v25 = vld [vmem:[%s0 + $0x20] sm:$0xf]
    %v26 = vld [vmem:[%s0 + $0x24] sm:$0xf]
    %v27 = vld [vmem:[%s0 + $0x28] sm:$0xf]
    %v28 = vld [vmem:[%s0 + $0x2c] sm:$0xf]
    %v29 = vld [vmem:[%s0 + $0x30] sm:$0xf]
    %v30 = vld [vmem:[%s0 + $0x34] sm:$0xf]
    %v31 = vld [vmem:[%s0 + $0x38] sm:$0xf]
    %v32 = vld [vmem:[%s0 + $0x3c] sm:$0xf]
    %v33 = vld [vmem:[%s1] sm:$0xf]
    %v34 = vld [vmem:[%s1 + $0x4] sm:$0xf]
    %v35 = vld [vmem:[%s1 + $0x8] sm:$0xf]
    %v36 = vld [vmem:[%s1 + $0xc] sm:$0xf]
    %v37 = vld [vmem:[%s1 + $0x10] sm:$0x3]
    %v54 = vunpack.c.l.b16 %v17
    %v55 = vunpack.c.l.b16 %v18
    %v56 = vunpack.c.l.b16 %v19
    %v57 = vunpack.c.l.b16 %v20
    %v58 = vunpack.c.l.b16 %v21
    %v59 = vunpack.c.l.b16 %v22
    %v60 = vunpack.c.l.b16 %v23
    %v61 = vunpack.c.l.b16 %v24
    %v62 = vunpack.c.l.b16 %v25
    %v63 = vunpack.c.l.b16 %v26
    %v64 = vunpack.c.l.b16 %v27
    %v65 = vunpack.c.l.b16 %v28
    %v66 = vunpack.c.l.b16 %v29
    %v67 = vunpack.c.l.b16 %v30
    %v68 = vunpack.c.l.b16 %v31
    %v69 = vunpack.c.l.b16 %v32
    %v70 = vpack.c.b16 %v55, %v54
    %v71 = vpack.c.b16 %v57, %v56
    %v72 = vpack.c.b16 %v59, %v58
    %v73 = vpack.c.b16 %v61, %v60
    %v74 = vpack.c.b16 %v63, %v62
    %v75 = vpack.c.b16 %v65, %v64
    %v76 = vpack.c.b16 %v67, %v66
    %v77 = vpack.c.b16 %v69, %v68
    %v83 = vunpack.c.l.b16 %v33
    %v84 = vunpack.c.l.b16 %v34
    %v85 = vunpack.c.l.b16 %v35
    %v86 = vunpack.c.l.b16 %v36
    %v87 = vunpack.c.l.b16 %v37
    %v88 = vpack.c.b16 %v84, %v83
    %v89 = vpack.c.b16 %v86, %v85
    %v90 = vpack.c.b16 %v87, %v87
    %vm93 = vcmask 293888
    %v95 = vsel %vm93, %v70, 0
    %v98 = vsel %vm93, %v71, 0
    %v101 = vsel %vm93, %v72, 0
    %v104 = vsel %vm93, %v73, 0
    %v107 = vsel %vm93, %v74, 0
    %v110 = vsel %vm93, %v75, 0
    %v113 = vsel %vm93, %v76, 0
    %v116 = vsel %vm93, %v77, 0
    %vm118 = vcmask 1041408
    %v120 = vsel %vm118, %v90, 0
    %122 = vmatprep.subr.bf16.mxu0 0
    %123 = vmatpush1.bf16.msra.mxu0 %v88
    %124 = vmatprep.subr.bf16.mxu0 0
    %125 = vmatpush1.bf16.msra.mxu0 %v89
    %126 = vmatprep.subr.bf16.mxu0 0
    %127 = vmatpush1.bf16.msra.mxu0 %v120
    %128 = vmatprep.subr.bf16.mxu0 0
    %129 = vmatpush1.bf16.msra.mxu0 0
    %130 = vmatprep.subr.bf16.mxu0 0
    %131 = vmatpush1.bf16.msra.mxu0 0
    %132 = vmatprep.subr.bf16.mxu0 0
    %133 = vmatpush1.bf16.msra.mxu0 0
    %134 = vmatprep.subr.bf16.mxu0 0
    %135 = vmatpush1.bf16.msra.mxu0 0
    %136 = vmatprep.subr.bf16.mxu0 0
    %137 = vmatpush1.bf16.msra.mxu0 0
    %138 = vmatprep.subr.bf16.mxu0 0
    %139 = vmatpush1.bf16.msra.mxu0 0
    %140 = vmatprep.subr.bf16.mxu0 0
    %141 = vmatpush1.bf16.msra.mxu0 0
    %142 = vmatprep.subr.bf16.mxu0 0
    %143 = vmatpush1.bf16.msra.mxu0 0
    %144 = vmatprep.subr.bf16.mxu0 0
    %145 = vmatpush1.bf16.msra.mxu0 0
    %146 = vmatprep.subr.bf16.mxu0 0
    %147 = vmatpush1.bf16.msra.mxu0 0
    %148 = vmatprep.subr.bf16.mxu0 0
    %149 = vmatpush1.bf16.msra.mxu0 0
    %150 = vmatprep.subr.bf16.mxu0 0
    %151 = vmatpush1.bf16.msra.mxu0 0
    %152 = vmatprep.subr.bf16.mxu0 0
    %153 = vmatpush1.bf16.msra.mxu0 0
    %154 = vmatprep.mubr.bf16.mxu0 0
    %155 = vmatmul.mubr.bf16.gmra.mrb[0].mxu0 %v95
    %v156 = vpop.f32.mrb[0].mxu0
    %v157 = vadd.f32 0.0, %v156
    %v158 = vpop.f32.mrb[0].mxu0
    %v159 = vpop.f32.mrb[0].mxu0
    %v160 = vadd.f32 0.0, %v159
    %v161 = vpop.f32.mrb[0].mxu0
    %162 = vmatprep.mubr.bf16.mxu0 0
    %163 = vmatmul.mubr.bf16.gmra.mrb[0].mxu0 %v98
    %v164 = vpop.f32.mrb[0].mxu0
    %v165 = vadd.f32 0.0, %v164
    %v166 = vpop.f32.mrb[0].mxu0
    %v167 = vpop.f32.mrb[0].mxu0
    %v168 = vadd.f32 0.0, %v167
    %v169 = vpop.f32.mrb[0].mxu0
    %170 = vmatprep.mubr.bf16.mxu0 0
    %171 = vmatmul.mubr.bf16.gmra.mrb[0].mxu0 %v101
    %v172 = vpop.f32.mrb[0].mxu0
    %v173 = vadd.f32 0.0, %v172
    %v174 = vpop.f32.mrb[0].mxu0
    %v175 = vpop.f32.mrb[0].mxu0
    %v176 = vadd.f32 0.0, %v175
    %v177 = vpop.f32.mrb[0].mxu0
    %178 = vmatprep.mubr.bf16.mxu0 0
    %179 = vmatmul.mubr.bf16.gmra.mrb[0].mxu0 %v104
    %v180 = vpop.f32.mrb[0].mxu0
    %v181 = vadd.f32 0.0, %v180
    %v182 = vpop.f32.mrb[0].mxu0
    %v183 = vpop.f32.mrb[0].mxu0
    %v184 = vadd.f32 0.0, %v183
    %v185 = vpop.f32.mrb[0].mxu0
    %186 = vmatprep.mubr.bf16.mxu0 0
    %187 = vmatmul.mubr.bf16.gmra.mrb[0].mxu0 %v107
    %v188 = vpop.f32.mrb[0].mxu0
    %v189 = vadd.f32 0.0, %v188
    %v190 = vpop.f32.mrb[0].mxu0
    %v191 = vpop.f32.mrb[0].mxu0
    %v192 = vadd.f32 0.0, %v191
    %v193 = vpop.f32.mrb[0].mxu0
    %194 = vmatprep.mubr.bf16.mxu0 0
    %195 = vmatmul.mubr.bf16.gmra.mrb[0].mxu0 %v110
    %v196 = vpop.f32.mrb[0].mxu0
    %v197 = vadd.f32 0.0, %v196
    %v198 = vpop.f32.mrb[0].mxu0
    %v199 = vpop.f32.mrb[0].mxu0
    %v200 = vadd.f32 0.0, %v199
    %v201 = vpop.f32.mrb[0].mxu0
    %202 = vmatprep.mubr.bf16.mxu0 0
    %203 = vmatmul.mubr.bf16.gmra.mrb[0].mxu0 %v113
    %v204 = vpop.f32.mrb[0].mxu0
    %v205 = vadd.f32 0.0, %v204
    %v206 = vpop.f32.mrb[0].mxu0
    %v207 = vpop.f32.mrb[0].mxu0
    %v208 = vadd.f32 0.0, %v207
    %v209 = vpop.f32.mrb[0].mxu0
    %210 = vmatprep.mubr.bf16.mxu0 0
    %211 = vmatmul.mubr.bf16.gmra.mrb[0].mxu0 %v116
    %v212 = vpop.f32.mrb[0].mxu0
    %v213 = vadd.f32 0.0, %v212
    %v214 = vpop.f32.mrb[0].mxu0
    %v215 = vpop.f32.mrb[0].mxu0
    %v216 = vadd.f32 0.0, %v215
    %v217 = vpop.f32.mrb[0].mxu0
    %218 = vdwg.mxu0
    %v219 = vpack.c.bf16 %v160, %v157
    %v220 = vpack.c.bf16 %v168, %v165
    %v221 = vpack.c.bf16 %v176, %v173
    %v222 = vpack.c.bf16 %v184, %v181
    %v223 = vpack.c.bf16 %v192, %v189
    %v224 = vpack.c.bf16 %v200, %v197
    %v225 = vpack.c.bf16 %v208, %v205
    %v226 = vpack.c.bf16 %v216, %v213
    %v235 = vunpack.c.l.b16 %v219
    %v236 = vunpack.c.h.b16 %v219
    %v237 = vunpack.c.l.b16 %v220
    %v238 = vunpack.c.h.b16 %v220
    %v239 = vunpack.c.l.b16 %v221
    %v240 = vunpack.c.h.b16 %v221
    %v241 = vunpack.c.l.b16 %v222
    %v242 = vunpack.c.h.b16 %v222
    %v243 = vunpack.c.l.b16 %v223
    %v244 = vunpack.c.h.b16 %v223
    %v245 = vunpack.c.l.b16 %v224
    %v246 = vunpack.c.h.b16 %v224
    %v247 = vunpack.c.l.b16 %v225
    %v248 = vunpack.c.h.b16 %v225
    %v249 = vunpack.c.l.b16 %v226
    %v250 = vunpack.c.h.b16 %v226
    %v251 = vpack.c.b16 %v235, %v235
    %v252 = vpack.c.b16 %v236, %v236
    %v253 = vpack.c.b16 %v237, %v237
    %v254 = vpack.c.b16 %v238, %v238
    %v255 = vpack.c.b16 %v239, %v239
    %v256 = vpack.c.b16 %v240, %v240
    %v257 = vpack.c.b16 %v241, %v241
    %v258 = vpack.c.b16 %v242, %v242
    %v259 = vpack.c.b16 %v243, %v243
    %v260 = vpack.c.b16 %v244, %v244
    %v261 = vpack.c.b16 %v245, %v245
    %v262 = vpack.c.b16 %v246, %v246
    %v263 = vpack.c.b16 %v247, %v247
    %v264 = vpack.c.b16 %v248, %v248
    %v265 = vpack.c.b16 %v249, %v249
    %v266 = vpack.c.b16 %v250, %v250
    %283 = vst [vmem:[#allocation2] sm:$0xf] %v251
    %284 = vst [vmem:[#allocation2 + $0x4] sm:$0xf] %v252
    %285 = vst [vmem:[#allocation2 + $0x8] sm:$0xf] %v253
    %286 = vst [vmem:[#allocation2 + $0xc] sm:$0xf] %v254
    %287 = vst [vmem:[#allocation2 + $0x10] sm:$0xf] %v255
    %288 = vst [vmem:[#allocation2 + $0x14] sm:$0xf] %v256
    %289 = vst [vmem:[#allocation2 + $0x18] sm:$0xf] %v257
    %290 = vst [vmem:[#allocation2 + $0x1c] sm:$0xf] %v258
    %291 = vst [vmem:[#allocation2 + $0x20] sm:$0xf] %v259
    %292 = vst [vmem:[#allocation2 + $0x24] sm:$0xf] %v260
    %293 = vst [vmem:[#allocation2 + $0x28] sm:$0xf] %v261
    %294 = vst [vmem:[#allocation2 + $0x2c] sm:$0xf] %v262
    %295 = vst [vmem:[#allocation2 + $0x30] sm:$0xf] %v263
    %296 = vst [vmem:[#allocation2 + $0x34] sm:$0xf] %v264
    %297 = vst [vmem:[#allocation2 + $0x38] sm:$0xf] %v265
    %298 = vst [vmem:[#allocation2 + $0x3c] sm:$0xf] %v266
    %p299 = scmp.eq.s32.totalorder 0, 0
    // Predicated region
    $region10: #{tpu_custom_call.1} parent=1 // pred_check
      %p300 = pneg %p299
    $region11: #{tpu_custom_call.1} parent=1 // pred_check_branch
      %302 = sbr.rel (%p300) target = $region13
    $region12: #{tpu_custom_call.1} parent=1 // pred_region
      %303 = vst [vmem:[#allocation4] sm:$0x1] 0.0
      %304 = vst [vmem:[#allocation6] sm:$0x1] 0.0
    $region13: #{tpu_custom_call.1} parent=1 // pred_fallthru
      _
    %v305 = vld [vmem:[#allocation4] sm:$0x1]
    %v306 = vadd.f32 %v157, %v160
    %v307 = vadd.f32 %v306, %v165
    %v308 = vadd.f32 %v307, %v168
    %v309 = vadd.f32 %v308, %v173
    %v310 = vadd.f32 %v309, %v176
    %v311 = vadd.f32 %v310, %v181
    %v312 = vadd.f32 %v311, %v184
    %v313 = vadd.f32 %v312, %v189
    %v314 = vadd.f32 %v313, %v192
    %v315 = vadd.f32 %v314, %v197
    %v316 = vadd.f32 %v315, %v200
    %v317 = vadd.f32 %v316, %v205
    %v318 = vadd.f32 %v317, %v208
    %v319 = vadd.f32 %v318, %v213
    %v320 = vadd.f32 %v319, %v216
    %v321 = vrot.slane %v320, 4
    %v322 = vadd.f32 %v320, %v321
    %v323 = vrot.slane %v322, 2
    %v324 = vadd.f32 %v322, %v323
    %v325 = vrot.slane %v324, 1
    %v326 = vadd.f32 %v324, %v325
    %v327 = vadd.f32 %v305, %v326
    %328 = vst [vmem:[#allocation4] sm:$0x1] %v327
    %v329 = vld [vmem:[#allocation6] sm:$0x1]
    %v330 = vmul.f32 %v157, %v157
    %v331 = vmul.f32 %v160, %v160
    %v332 = vmul.f32 %v165, %v165
    %v333 = vmul.f32 %v168, %v168
    %v334 = vmul.f32 %v173, %v173
    %v335 = vmul.f32 %v176, %v176
    %v336 = vmul.f32 %v181, %v181
    %v337 = vmul.f32 %v184, %v184
    %v338 = vmul.f32 %v189, %v189
    %v339 = vmul.f32 %v192, %v192
    %v340 = vmul.f32 %v197, %v197
    %v341 = vmul.f32 %v200, %v200
    %v342 = vmul.f32 %v205, %v205
    %v343 = vmul.f32 %v208, %v208
    %v344 = vmul.f32 %v213, %v213
    %v345 = vmul.f32 %v216, %v216
    %v346 = vadd.f32 %v330, %v331
    %v347 = vadd.f32 %v346, %v332
    %v348 = vadd.f32 %v347, %v333
    %v349 = vadd.f32 %v348, %v334
    %v350 = vadd.f32 %v349, %v335
    %v351 = vadd.f32 %v350, %v336
    %v352 = vadd.f32 %v351, %v337
    %v353 = vadd.f32 %v352, %v338
    %v354 = vadd.f32 %v353, %v339
    %v355 = vadd.f32 %v354, %v340
    %v356 = vadd.f32 %v355, %v341
    %v357 = vadd.f32 %v356, %v342
    %v358 = vadd.f32 %v357, %v343
    %v359 = vadd.f32 %v358, %v344
    %v360 = vadd.f32 %v359, %v345
    %v361 = vrot.slane %v360, 4
    %v362 = vadd.f32 %v360, %v361
    %v363 = vrot.slane %v362, 2
    %v364 = vadd.f32 %v362, %v363
    %v365 = vrot.slane %v364, 1
    %v366 = vadd.f32 %v364, %v365
    %v367 = vadd.f32 %v329, %v366
    %368 = vst [vmem:[#allocation6] sm:$0x1] %v367
    // Predicated region
    $region14: #{tpu_custom_call.1} parent=1 // pred_check
      _
    $region15: #{tpu_custom_call.1} parent=1 // pred_check_branch
      %370 = sbr.rel (0) target = $region17
    $region16: #{tpu_custom_call.1} parent=1 // pred_region
      %s372 = ssub.s32 1024, 1024
      %373 = vsyncadd [#allocation3], %s372
      %s374 = sshll.u32 [#allocation2], 4
      %s375 = int_to_ptr.vmem [resolvable:$true] %s374
      %380 = dma.vmem_to_hbm [thread:$0]  %s375, 1024, %s2, [#allocation3], 64, 64, 4
    $region17: #{tpu_custom_call.1} parent=1 // pred_fallthru
      _
    // Predicated region
    $region18: #{tpu_custom_call.1} parent=1 // pred_check
      _
    $region19: #{tpu_custom_call.1} parent=1 // pred_check_branch
      %382 = sbr.rel (0) target = $region21
    $region20: #{tpu_custom_call.1} parent=1 // pred_region
      %s384 = ssub.s32 16, 16
      %385 = vsyncadd [#allocation5], %s384
      %s387 = sshll.u32 [#allocation4], 4
      %s388 = int_to_ptr.vmem [resolvable:$true] %s387
      %390 = dma.vmem_to_hbm [thread:$0]  %s388, 16, %s3, [#allocation5]
    $region21: #{tpu_custom_call.1} parent=1 // pred_fallthru
      _
    // Predicated region
    $region22: #{tpu_custom_call.1} parent=1 // pred_check
      _
    $region23: #{tpu_custom_call.1} parent=1 // pred_check_branch
      %392 = sbr.rel (0) target = $region25
    $region24: #{tpu_custom_call.1} parent=1 // pred_region
      %s394 = ssub.s32 16, 16
      %395 = vsyncadd [#allocation5], %s394
      %s397 = sshll.u32 [#allocation6], 4
      %s398 = int_to_ptr.vmem [resolvable:$true] %s397
      %400 = dma.vmem_to_hbm [thread:$0]  %s398, 16, %s4, [#allocation5]
    $region25: #{tpu_custom_call.1} parent=1 // pred_fallthru
      _
    // Predicated region
    $region26: #{tpu_custom_call.1} parent=1 // pred_check
      _
    $region27: #{tpu_custom_call.1} parent=1 // pred_check_branch
      %402 = sbr.rel (0) target = $region29
    $region28: #{tpu_custom_call.1} parent=1 // pred_region
      %403 = dma.done [#allocation3], 1024
    $region29: #{tpu_custom_call.1} parent=1 // pred_fallthru
      _
    // Predicated region
    $region30: #{tpu_custom_call.1} parent=1 // pred_check
      _
    $region31: #{tpu_custom_call.1} parent=1 // pred_check_branch
      %405 = sbr.rel (0) target = $region33
    $region32: #{tpu_custom_call.1} parent=1 // pred_region
      %406 = dma.done [#allocation5], 16
    $region33: #{tpu_custom_call.1} parent=1 // pred_fallthru
      _
    // Predicated region
    $region34: #{tpu_custom_call.1} parent=1 // pred_check
      _
    $region35: #{tpu_custom_call.1} parent=1 // pred_check_branch
      %408 = sbr.rel (0) target = $region37
    $region36: #{tpu_custom_call.1} parent=1 // pred_region
      %409 = dma.done [#allocation5], 16
    $region37: #{tpu_custom_call.1} parent=1 // pred_fallthru
      _
    %410 = vsyncpa [#allocation3], 1
    %411 = vsyncpa [#allocation5], 1

</llo_original>
